<compile_context>
chip_gen: v7x
topology: tpu7x:2x2x1
jax: 0.10.0
libtpu: 0.0.40
codegen_flags: <defaults>
</compile_context>

<pallas_src>
import jax
import jax.numpy as jnp
from jax.experimental import pallas as pl
from jax.experimental.pallas import tpu as pltpu


def _patch_embed_kernel(patches_ref, w_ref, pos_ref, out_ref):
    # patches_ref: (Bt*N, Pk) bf16   flattened patches for Bt images
    # w_ref:       (Pk, Dp)   bf16   weight, rows permuted to (c p1 p2), K/D padded
    # pos_ref:     (N+1, Dp)  f32    row 0 = cls + pos[0]; rows 1.. = pos + bias
    # out_ref:     (Bt, N+1, Dp)     output block
    bt, n1, dp = out_ref.shape
    n = n1 - 1

    # One full-height MXU GEMM for the whole batch block, f32 accumulate.
    emb = jnp.dot(patches_ref[...], w_ref[...],
                  preferred_element_type=jnp.float32)          # (Bt*N, Dp)
    emb = emb.reshape(bt, n, dp) + pos_ref[1:, :][None]        # + (pos + bias)
    out_ref[:, 1:, :] = emb.astype(out_ref.dtype)

    # cls row: pos row 0 already holds cls_token + pos[0]; just broadcast it.
    cls_row = pos_ref[0:1, :]                                  # (1, Dp)
    out_ref[:, 0:1, :] = jnp.broadcast_to(
        cls_row[None], (bt, 1, dp)).astype(out_ref.dtype)


def patch_embedding(x, w, b, cls_token, pos_embedding, patch_size, *,
                    out_dtype=None):
    """x: (B, C, H, W); w: (P, D); b: (D,); cls: (1,1,D); pos: (1,N+1,D).

    Returns (B, N+1, D) in `out_dtype` (default: x.dtype), matching the
    PyTorch module's forward.
    """
    B, C, H, W = x.shape
    p = patch_size
    assert H % p == 0 and W % p == 0, "image size must be divisible by patch size"
    h, wn = H // p, W // p
    N = h * wn
    P, D = w.shape
    assert P == C * p * p, "weight in_features must equal C * patch_size**2"
    out_dtype = x.dtype if out_dtype is None else out_dtype
    out_itemsize = jnp.dtype(out_dtype).itemsize

    # Lane-dense padded sizes (zeros contribute nothing to the GEMM).
    Dp = pl.cdiv(D, 128) * 128
    Pk = pl.cdiv(P, 128) * 128

    # Patchify glue: 'b c (h p1) (w p2) -> (b h w) (c p1 p2)'.  Cast to bf16
    # first so the cast fuses into the same transpose fusion; the
    # (p1 p2 c)->(c p1 p2) row permutation of P is compensated on W below.
    xb = x.astype(jnp.bfloat16)
    patches = xb.reshape(B, C, h, p, wn, p)            # (b, c, h, p1, w, p2)
    patches = patches.transpose(0, 2, 4, 1, 3, 5)      # (b, h, w, c, p1, p2)
    patches = patches.reshape(B * N, P)                # (B*N, P)
    if Pk != P:
        patches = jnp.pad(patches, ((0, 0), (0, Pk - P)))

    # Weight: permute rows from (p1 p2 c) to (c p1 p2) order, pad K and D.
    w_perm = w.reshape(p, p, C, D).transpose(2, 0, 1, 3).reshape(P, D)
    w_perm = jnp.pad(w_perm, ((0, Pk - P), (0, Dp - D)))
    w_bf16 = w_perm.astype(jnp.bfloat16)

    # Fold linear bias into pos rows 1.. and cls token into pos row 0 (f32).
    pos_full = pos_embedding.reshape(N + 1, D).astype(jnp.float32)
    pos_full = pos_full.at[1:].add(b.astype(jnp.float32))
    pos_full = pos_full.at[0].add(cls_token.reshape(D).astype(jnp.float32))
    if Dp != D:
        pos_full = jnp.pad(pos_full, ((0, 0), (0, Dp - D)))

    # --- batch-block (Bt) selection from a VMEM budget ----------------------
    resident_bytes = Pk * Dp * 2 + (N + 1) * Dp * 4          # weight + pos

    def _block_bytes(bt_):
        stream = bt_ * N * Pk * 2 + bt_ * (N + 1) * Dp * out_itemsize
        return 2 * stream                                    # double-buffered

    budget = 40 * 1024 * 1024        # conservative: leaves headroom on v7x 64 MiB
    bt = 1
    for cand in range(B, 0, -1):
        if B % cand != 0:
            continue
        # BlockSpec last-two-dim rule: (cand*N) must be 8-aligned unless it is
        # the full row extent (single block over batch).
        if cand != B and (cand * N) % 8 != 0:
            continue
        if resident_bytes + _block_bytes(cand) <= budget:
            bt = cand
            break
    grid_b = B // bt

    need = resident_bytes + _block_bytes(bt)
    vmem_limit = int(min(60 * 1024 * 1024,
                         max(32 * 1024 * 1024, need * 5 // 4)))

    flops = 2 * B * N * Pk * Dp
    bytes_accessed = (B * N * Pk * 2 + Pk * Dp * 2 + (N + 1) * Dp * 4
                      + B * (N + 1) * Dp * out_itemsize)
    cost = pl.CostEstimate(flops=flops, transcendentals=0,
                           bytes_accessed=bytes_accessed)

    def _build(in_specs):
        return pl.pallas_call(
            _patch_embed_kernel,
            out_shape=jax.ShapeDtypeStruct((B, N + 1, Dp), out_dtype),
            grid=(grid_b,),
            in_specs=in_specs,
            out_specs=pl.BlockSpec((bt, N + 1, Dp), lambda i: (i, 0, 0)),
            compiler_params=pltpu.CompilerParams(
                dimension_semantics=("parallel",),
                vmem_limit_bytes=vmem_limit,
            ),
            cost_estimate=cost,
        )

    patches_spec = pl.BlockSpec((bt * N, Pk), lambda i: (i, 0))
    try:
        # Grid-invariant weight / pos: single-buffer (saves VMEM, no perf cost).
        in_specs = [
            patches_spec,
            pl.BlockSpec((Pk, Dp), lambda i: (0, 0),
                         pipeline_mode=pl.Buffered(1)),
            pl.BlockSpec((N + 1, Dp), lambda i: (0, 0),
                         pipeline_mode=pl.Buffered(1)),
        ]
        out = _build(in_specs)(patches, w_bf16, pos_full)
    except Exception:
        # Fallback: default (double-buffered) resident operands.
        in_specs = [
            patches_spec,
            pl.BlockSpec((Pk, Dp), lambda i: (0, 0)),
            pl.BlockSpec((N + 1, Dp), lambda i: (0, 0)),
        ]
        out = _build(in_specs)(patches, w_bf16, pos_full)

    return out[:, :, :D] if Dp != D else out


def reference(x, w, b, cls_token, pos_embedding, patch_size):
    # Pure-f32 reference with the original PyTorch semantics:
    # 'b c (h p1) (w p2) -> b (h w) (p1 p2 c)', Linear, cat(cls), + pos.
    B, C, H, W = x.shape
    p = patch_size
    h, wn = H // p, W // p
    patches = x.reshape(B, C, h, p, wn, p).transpose(0, 2, 4, 3, 5, 1)
    patches = patches.reshape(B, h * wn, p * p * C)
    emb = patches @ w + b
    cls = jnp.broadcast_to(cls_token.reshape(1, 1, -1), (B, 1, w.shape[1]))
    out = jnp.concatenate([cls, emb], axis=1)
    return out + pos_embedding


if __name__ == "__main__":
    # Small shapes consistent with the module's forward:
    # image_size=16, patch_size=4, channels=4, dim=32, batch=2
    image_size, patch_size, channels, dim, batch = 16, 4, 4, 32, 2
    num_patches = (image_size // patch_size) ** 2          # 16
    patch_dim = channels * patch_size ** 2                  # 64

    key = jax.random.PRNGKey(0)
    kx, kw, kb, kc, kp = jax.random.split(key, 5)

    x = jax.random.normal(kx, (batch, channels, image_size, image_size),
                          dtype=jnp.float32)
    # nn.Linear(patch_dim, dim): torch weight is (dim, patch_dim); we store the
    # transposed (patch_dim, dim) matrix used on the right of the matmul.
    w = jax.random.normal(kw, (patch_dim, dim), dtype=jnp.float32) * 0.02
    b = jax.random.normal(kb, (dim,), dtype=jnp.float32) * 0.02
    cls_token = jax.random.normal(kc, (1, 1, dim), dtype=jnp.float32)
    pos_embedding = jax.random.normal(kp, (1, num_patches + 1, dim),
                                      dtype=jnp.float32)

    out = patch_embedding(x, w, b, cls_token, pos_embedding, patch_size)
    out = jax.block_until_ready(out)

    ref = reference(x, w, b, cls_token, pos_embedding, patch_size)
    assert out.shape == (batch, num_patches + 1, dim), out.shape
    # Matmul operands are bf16 (f32 accumulate): ~1e-2 accuracy at these shapes.
    assert jnp.allclose(out, ref, atol=2e-2, rtol=2e-2), "mismatch vs reference"

    print("KERNEL_OK")
</pallas_src>

<mosaic_0001>
module attributes {stable_mosaic.version = 11 : i64} {
  func.func @_patch_embed_kernel(%arg0: i32, %arg1: memref<32x128xbf16, #tpu.memory_space<vmem>>, %arg2: memref<128x128xbf16, #tpu.memory_space<vmem>>, %arg3: memref<17x128xf32, #tpu.memory_space<vmem>>, %arg4: memref<2x17x128xf32, #tpu.memory_space<vmem>>) attributes {dimension_semantics = [#tpu.dimension_semantics<parallel>], iteration_bounds = array<i64: 1>, scalar_prefetch = 0 : i64, scratch_operands = 0 : i64, tpu.core_type = #tpu.core_type<tc>, window_params = [{transform_indices = @transform_0, window_bounds = array<i64: 32, 128>}, {pipeline_mode = #tpu.pipeline_mode<synchronous>, transform_indices = @transform_1, window_bounds = array<i64: 128, 128>}, {pipeline_mode = #tpu.pipeline_mode<synchronous>, transform_indices = @transform_2, window_bounds = array<i64: 17, 128>}, {transform_indices = @transform_3, window_bounds = array<i64: 2, 17, 128>}]} {
    %c0 = arith.constant 0 : index
    %c0_0 = arith.constant 0 : index
    %0 = vector.load %arg1[%c0, %c0_0] : memref<32x128xbf16, #tpu.memory_space<vmem>>, vector<32x128xbf16>
    %c0_1 = arith.constant 0 : index
    %c0_2 = arith.constant 0 : index
    %1 = vector.load %arg2[%c0_1, %c0_2] : memref<128x128xbf16, #tpu.memory_space<vmem>>, vector<128x128xbf16>
    %cst = arith.constant dense<0.000000e+00> : vector<32x128xf32>
    %2 = tpu.matmul %0, %1, %cst {dimension_numbers = #tpu.dot_dimension_numbers<[1], [0], [0], [1], [0, 0, 1, 1], [], []>} : vector<32x128xbf16>, vector<128x128xbf16>, vector<32x128xf32> -> vector<32x128xf32>
    %3 = vector.shape_cast %2 : vector<32x128xf32> to vector<2x16x128xf32>
    %c1 = arith.constant 1 : index
    %c0_3 = arith.constant 0 : index
    %4 = vector.load %arg3[%c1, %c0_3] : memref<17x128xf32, #tpu.memory_space<vmem>>, vector<16x128xf32>
    %5 = vector.shape_cast %4 : vector<16x128xf32> to vector<1x16x128xf32>
    %6 = vector.broadcast %5 : vector<1x16x128xf32> to vector<2x16x128xf32>
    %7 = arith.addf %3, %6 : vector<2x16x128xf32>
    %c0_4 = arith.constant 0 : index
    %c1_5 = arith.constant 1 : index
    %c0_6 = arith.constant 0 : index
    %8 = vector.load %arg4[%c0_4, %c1_5, %c0_6] : memref<2x17x128xf32, #tpu.memory_space<vmem>>, vector<2x16x128xf32>
    tpu.vector_store %arg4[%c0_4, %c1_5, %c0_6], %7 {strides = array<i32>} : memref<2x17x128xf32, #tpu.memory_space<vmem>>, vector<2x16x128xf32>,
    %c0_7 = arith.constant 0 : index
    %c0_8 = arith.constant 0 : index
    %9 = vector.load %arg3[%c0_7, %c0_8] : memref<17x128xf32, #tpu.memory_space<vmem>>, vector<1x128xf32>
    %10 = vector.shape_cast %9 : vector<1x128xf32> to vector<1x1x128xf32>
    %11 = vector.shape_cast %10 : vector<1x1x128xf32> to vector<1x1x128xf32>
    %12 = vector.broadcast %11 : vector<1x1x128xf32> to vector<2x1x128xf32>
    %c0_9 = arith.constant 0 : index
    %c0_10 = arith.constant 0 : index
    %c0_11 = arith.constant 0 : index
    %13 = vector.load %arg4[%c0_9, %c0_10, %c0_11] : memref<2x17x128xf32, #tpu.memory_space<vmem>>, vector<2x1x128xf32>
    tpu.vector_store %arg4[%c0_9, %c0_10, %c0_11], %12 {strides = array<i32>} : memref<2x17x128xf32, #tpu.memory_space<vmem>>, vector<2x1x128xf32>,
    return
  }
  func.func @transform_0(%arg0: i32) -> (i32, i32) {
    %c0_i32 = arith.constant 0 : i32
    %c0_i32_0 = arith.constant 0 : i32
    return %arg0, %c0_i32 : i32, i32
  }
  func.func @transform_1(%arg0: i32) -> (i32, i32) {
    %c0_i32 = arith.constant 0 : i32
    %c0_i32_0 = arith.constant 0 : i32
    %c0_i32_1 = arith.constant 0 : i32
    return %c0_i32, %c0_i32_0 : i32, i32
  }
  func.func @transform_2(%arg0: i32) -> (i32, i32) {
    %c0_i32 = arith.constant 0 : i32
    %c0_i32_0 = arith.constant 0 : i32
    %c0_i32_1 = arith.constant 0 : i32
    return %c0_i32, %c0_i32_0 : i32, i32
  }
  func.func @transform_3(%arg0: i32) -> (i32, i32, i32) {
    %c0_i32 = arith.constant 0 : i32
    %c0_i32_0 = arith.constant 0 : i32
    %c0_i32_1 = arith.constant 0 : i32
    return %arg0, %c0_i32, %c0_i32_0 : i32, i32, i32
  }
}

module attributes {stable_mosaic.version = 11 : i64} {
  func.func @_patch_embed_kernel(%arg0: i32, %arg1: memref<32x128xbf16, #tpu.memory_space<vmem>>, %arg2: memref<128x128xbf16, #tpu.memory_space<vmem>>, %arg3: memref<17x128xf32, #tpu.memory_space<vmem>>, %arg4: memref<2x17x128xf32, #tpu.memory_space<vmem>>) attributes {dimension_semantics = [#tpu.dimension_semantics<parallel>], iteration_bounds = array<i64: 1>, scalar_prefetch = 0 : i64, scratch_operands = 0 : i64, tpu.core_type = #tpu.core_type<tc>, window_params = [{transform_indices = @transform_0, window_bounds = array<i64: 32, 128>}, {pipeline_mode = #tpu.pipeline_mode<synchronous>, transform_indices = @transform_1, window_bounds = array<i64: 128, 128>}, {pipeline_mode = #tpu.pipeline_mode<synchronous>, transform_indices = @transform_2, window_bounds = array<i64: 17, 128>}, {transform_indices = @transform_3, window_bounds = array<i64: 2, 17, 128>}]} {
    %c0 = arith.constant 0 : index
    %c0_0 = arith.constant 0 : index
    %0 = vector.load %arg1[%c0, %c0_0] : memref<32x128xbf16, #tpu.memory_space<vmem>>, vector<32x128xbf16>
    %c0_1 = arith.constant 0 : index
    %c0_2 = arith.constant 0 : index
    %1 = vector.load %arg2[%c0_1, %c0_2] : memref<128x128xbf16, #tpu.memory_space<vmem>>, vector<128x128xbf16>
    %cst = arith.constant dense<0.000000e+00> : vector<32x128xf32>
    %2 = tpu.matmul %0, %1, %cst {dimension_numbers = #tpu.dot_dimension_numbers<[1], [0], [0], [1], [0, 0, 1, 1], [], []>} : vector<32x128xbf16>, vector<128x128xbf16>, vector<32x128xf32> -> vector<32x128xf32>
    %3 = vector.shape_cast %2 : vector<32x128xf32> to vector<2x16x128xf32>
    %c1 = arith.constant 1 : index
    %c0_3 = arith.constant 0 : index
    %4 = vector.load %arg3[%c1, %c0_3] : memref<17x128xf32, #tpu.memory_space<vmem>>, vector<16x128xf32>
    %5 = vector.shape_cast %4 : vector<16x128xf32> to vector<1x16x128xf32>
    %6 = vector.broadcast %5 : vector<1x16x128xf32> to vector<2x16x128xf32>
    %7 = arith.addf %3, %6 : vector<2x16x128xf32>
    %c0_4 = arith.constant 0 : index
    %c1_5 = arith.constant 1 : index
    %c0_6 = arith.constant 0 : index
    %8 = vector.load %arg4[%c0_4, %c1_5, %c0_6] : memref<2x17x128xf32, #tpu.memory_space<vmem>>, vector<2x16x128xf32>
    tpu.vector_store %arg4[%c0_4, %c1_5, %c0_6], %7 {strides = array<i32>} : memref<2x17x128xf32, #tpu.memory_space<vmem>>, vector<2x16x128xf32>,
    %c0_7 = arith.constant 0 : index
    %c0_8 = arith.constant 0 : index
    %9 = vector.load %arg3[%c0_7, %c0_8] : memref<17x128xf32, #tpu.memory_space<vmem>>, vector<1x128xf32>
    %10 = vector.shape_cast %9 : vector<1x128xf32> to vector<1x1x128xf32>
    %11 = vector.shape_cast %10 : vector<1x1x128xf32> to vector<1x1x128xf32>
    %12 = vector.broadcast %11 : vector<1x1x128xf32> to vector<2x1x128xf32>
    %c0_9 = arith.constant 0 : index
    %c0_10 = arith.constant 0 : index
    %c0_11 = arith.constant 0 : index
    %13 = vector.load %arg4[%c0_9, %c0_10, %c0_11] : memref<2x17x128xf32, #tpu.memory_space<vmem>>, vector<2x1x128xf32>
    tpu.vector_store %arg4[%c0_9, %c0_10, %c0_11], %12 {strides = array<i32>} : memref<2x17x128xf32, #tpu.memory_space<vmem>>, vector<2x1x128xf32>,
    return
  }
  func.func @transform_0(%arg0: i32) -> (i32, i32) {
    %c0_i32 = arith.constant 0 : i32
    %c0_i32_0 = arith.constant 0 : i32
    return %arg0, %c0_i32 : i32, i32
  }
  func.func @transform_1(%arg0: i32) -> (i32, i32) {
    %c0_i32 = arith.constant 0 : i32
    %c0_i32_0 = arith.constant 0 : i32
    %c0_i32_1 = arith.constant 0 : i32
    return %c0_i32, %c0_i32_0 : i32, i32
  }
  func.func @transform_2(%arg0: i32) -> (i32, i32) {
    %c0_i32 = arith.constant 0 : i32
    %c0_i32_0 = arith.constant 0 : i32
    %c0_i32_1 = arith.constant 0 : i32
    return %c0_i32, %c0_i32_0 : i32, i32
  }
  func.func @transform_3(%arg0: i32) -> (i32, i32, i32) {
    %c0_i32 = arith.constant 0 : i32
    %c0_i32_0 = arith.constant 0 : i32
    %c0_i32_1 = arith.constant 0 : i32
    return %arg0, %c0_i32, %c0_i32_0 : i32, i32, i32
  }
}

</mosaic_0001>

<llo_original>
// kernel: tpu_custom_call.1
$region0: #{tpu_custom_call.1}
  #allocation0 [shape = 'u32[]', space=smem, size = 0x4, offset = 0x4, fixed_abs, tag = 'smem constant byte address 0x4 - core index']
  #allocation1 [shape = 'u32[144,128]{1,0:T(1,128)}', space=vmem, size = 0x12000, scoped, tag = 'internal scratch']
  %s0 = inlined_call_operand.hbm [shape: bf16[32,128], index: 0, kind: input, shape index: {}]
  %s1 = inlined_call_operand.hbm [shape: bf16[128,128], index: 1, kind: input, shape index: {}]
  %s2 = inlined_call_operand.hbm [shape: f32[17,128], index: 2, kind: input, shape index: {}]
  %s3 = inlined_call_operand.vmem [shape: f32[2,17,128], index: 3, kind: output, shape index: {}]
  %s4 = sld [smem:[#allocation0]]
  $region34: #{tpu_custom_call.1} parent=0
    _
  %s6 = ssub.s32 1, %s4
  %s7 = scalar_select 0, %s6, %s4
  $region1: #{tpu_custom_call.1} parent=0
    #allocation2 [shape = 'u8[8192]{0}', space=vmem, size = 0x2000, scoped, tag = 'input window, operand 0, single buffered']
    #allocation3 [shape = 's32[1]{0}', space=sflag, size = 0x4, scoped, tag = 'scoped memory for tpu_custom_call.1']
    #allocation4 [shape = 'u8[32768]{0}', space=vmem, size = 0x8000, scoped, tag = 'input window, operand 1, single buffered']
    #allocation5 [shape = 's32[1]{0}', space=sflag, size = 0x4, scoped, tag = 'scoped memory for tpu_custom_call.1']
    #allocation6 [shape = 'u8[12288]{0}', space=vmem, size = 0x3000, scoped, tag = 'input window, operand 2, single buffered']
    %8 = vsyncpa [#allocation3], 0
    %9 = vsyncpa [#allocation5], 0
    // Predicated region
    $region2: #{tpu_custom_call.1} parent=1 // pred_check
      _
    $region3: #{tpu_custom_call.1} parent=1 // pred_check_branch
      %11 = sbr.rel (0) target = $region5
    $region4: #{tpu_custom_call.1} parent=1 // pred_region
      %s13 = ssub.s32 256, 256
      %14 = vsyncadd [#allocation3], %s13
      %s15 = sshll.u32 [#allocation2], 4
      %s16 = int_to_ptr.vmem [resolvable:$true] %s15
      %21 = dma.hbm_to_vmem [thread:$0]  %s0, 256, %s16, [#allocation3], 64, 64, 4
    $region5: #{tpu_custom_call.1} parent=1 // pred_fallthru
      _
    // Predicated region
    $region6: #{tpu_custom_call.1} parent=1 // pred_check
      _
    $region7: #{tpu_custom_call.1} parent=1 // pred_check_branch
      %23 = sbr.rel (0) target = $region9
    $region8: #{tpu_custom_call.1} parent=1 // pred_region
      %s25 = ssub.s32 1024, 1024
      %26 = vsyncadd [#allocation5], %s25
      %s27 = sshll.u32 [#allocation4], 4
      %s28 = int_to_ptr.vmem [resolvable:$true] %s27
      %33 = dma.hbm_to_vmem [thread:$0]  %s1, 1024, %s28, [#allocation5], 64, 64, 4
    $region9: #{tpu_custom_call.1} parent=1 // pred_fallthru
      _
    // Predicated region
    $region10: #{tpu_custom_call.1} parent=1 // pred_check
      _
    $region11: #{tpu_custom_call.1} parent=1 // pred_check_branch
      %35 = sbr.rel (0) target = $region13
    $region12: #{tpu_custom_call.1} parent=1 // pred_region
      %s37 = ssub.s32 384, 384
      %38 = vsyncadd [#allocation5], %s37
      %s39 = sshll.u32 [#allocation6], 4
      %s40 = int_to_ptr.vmem [resolvable:$true] %s39
      %45 = dma.hbm_to_vmem [thread:$0]  %s2, 384, %s40, [#allocation5], 128, 128, 8
    $region13: #{tpu_custom_call.1} parent=1 // pred_fallthru
      _
    // Predicated region
    $region14: #{tpu_custom_call.1} parent=1 // pred_check
      _
    $region15: #{tpu_custom_call.1} parent=1 // pred_check_branch
      %47 = sbr.rel (0) target = $region17
    $region16: #{tpu_custom_call.1} parent=1 // pred_region
      %48 = dma.done [#allocation3], 256
    $region17: #{tpu_custom_call.1} parent=1 // pred_fallthru
      _
    // Predicated region
    $region18: #{tpu_custom_call.1} parent=1 // pred_check
      _
    $region19: #{tpu_custom_call.1} parent=1 // pred_check_branch
      %50 = sbr.rel (0) target = $region21
    $region20: #{tpu_custom_call.1} parent=1 // pred_region
      %51 = dma.done [#allocation5], 1024
    $region21: #{tpu_custom_call.1} parent=1 // pred_fallthru
      _
    // Predicated region
    $region22: #{tpu_custom_call.1} parent=1 // pred_check
      _
    $region23: #{tpu_custom_call.1} parent=1 // pred_check_branch
      %53 = sbr.rel (0) target = $region25
    $region24: #{tpu_custom_call.1} parent=1 // pred_region
      %54 = dma.done [#allocation5], 384
    $region25: #{tpu_custom_call.1} parent=1 // pred_fallthru
      _
    %v56 = vld [vmem:[#allocation2] sm:$0xf]
    %v57 = vld [vmem:[#allocation2 + $0x4] sm:$0xf]
    %v58 = vld [vmem:[#allocation2 + $0x8] sm:$0xf]
    %v59 = vld [vmem:[#allocation2 + $0xc] sm:$0xf]
    %v60 = vld [vmem:[#allocation4] sm:$0xf]
    %v61 = vld [vmem:[#allocation4 + $0x4] sm:$0xf]
    %v62 = vld [vmem:[#allocation4 + $0x8] sm:$0xf]
    %v63 = vld [vmem:[#allocation4 + $0xc] sm:$0xf]
    %v64 = vld [vmem:[#allocation4 + $0x10] sm:$0xf]
    %v65 = vld [vmem:[#allocation4 + $0x14] sm:$0xf]
    %v66 = vld [vmem:[#allocation4 + $0x18] sm:$0xf]
    %v67 = vld [vmem:[#allocation4 + $0x1c] sm:$0xf]
    %v68 = vld [vmem:[#allocation4 + $0x20] sm:$0xf]
    %v69 = vld [vmem:[#allocation4 + $0x24] sm:$0xf]
    %v70 = vld [vmem:[#allocation4 + $0x28] sm:$0xf]
    %v71 = vld [vmem:[#allocation4 + $0x2c] sm:$0xf]
    %v72 = vld [vmem:[#allocation4 + $0x30] sm:$0xf]
    %v73 = vld [vmem:[#allocation4 + $0x34] sm:$0xf]
    %v74 = vld [vmem:[#allocation4 + $0x38] sm:$0xf]
    %v75 = vld [vmem:[#allocation4 + $0x3c] sm:$0xf]
    %v80 = vunpack.c.l.b16 %v56
    %v81 = vunpack.c.l.b16 %v57
    %v82 = vunpack.c.l.b16 %v58
    %v83 = vunpack.c.l.b16 %v59
    %v84 = vpack.c.b16 %v81, %v80
    %v85 = vpack.c.b16 %v83, %v82
    %v104 = vunpack.c.l.b16 %v60
    %v105 = vunpack.c.l.b16 %v61
    %v106 = vunpack.c.l.b16 %v62
    %v107 = vunpack.c.l.b16 %v63
    %v108 = vunpack.c.l.b16 %v64
    %v109 = vunpack.c.l.b16 %v65
    %v110 = vunpack.c.l.b16 %v66
    %v111 = vunpack.c.l.b16 %v67
    %v112 = vunpack.c.l.b16 %v68
    %v113 = vunpack.c.l.b16 %v69
    %v114 = vunpack.c.l.b16 %v70
    %v115 = vunpack.c.l.b16 %v71
    %v116 = vunpack.c.l.b16 %v72
    %v117 = vunpack.c.l.b16 %v73
    %v118 = vunpack.c.l.b16 %v74
    %v119 = vunpack.c.l.b16 %v75
    %v120 = vpack.c.b16 %v105, %v104
    %v121 = vpack.c.b16 %v107, %v106
    %v122 = vpack.c.b16 %v109, %v108
    %v123 = vpack.c.b16 %v111, %v110
    %v124 = vpack.c.b16 %v113, %v112
    %v125 = vpack.c.b16 %v115, %v114
    %v126 = vpack.c.b16 %v117, %v116
    %v127 = vpack.c.b16 %v119, %v118
    %136 = vmatprep.subr.bf16.mxu0 0
    %137 = vmatpush1.bf16.msra.mxu0 %v120
    %138 = vmatprep.subr.bf16.mxu0 0
    %139 = vmatpush1.bf16.msra.mxu0 %v121
    %140 = vmatprep.subr.bf16.mxu0 0
    %141 = vmatpush1.bf16.msra.mxu0 %v122
    %142 = vmatprep.subr.bf16.mxu0 0
    %143 = vmatpush1.bf16.msra.mxu0 %v123
    %144 = vmatprep.subr.bf16.mxu0 0
    %145 = vmatpush1.bf16.msra.mxu0 %v124
    %146 = vmatprep.subr.bf16.mxu0 0
    %147 = vmatpush1.bf16.msra.mxu0 %v125
    %148 = vmatprep.subr.bf16.mxu0 0
    %149 = vmatpush1.bf16.msra.mxu0 %v126
    %150 = vmatprep.subr.bf16.mxu0 0
    %151 = vmatpush1.bf16.msra.mxu0 %v127
    %152 = vmatprep.subr.bf16.mxu0 0
    %153 = vmatpush1.bf16.msra.mxu0 0
    %154 = vmatprep.subr.bf16.mxu0 0
    %155 = vmatpush1.bf16.msra.mxu0 0
    %156 = vmatprep.subr.bf16.mxu0 0
    %157 = vmatpush1.bf16.msra.mxu0 0
    %158 = vmatprep.subr.bf16.mxu0 0
    %159 = vmatpush1.bf16.msra.mxu0 0
    %160 = vmatprep.subr.bf16.mxu0 0
    %161 = vmatpush1.bf16.msra.mxu0 0
    %162 = vmatprep.subr.bf16.mxu0 0
    %163 = vmatpush1.bf16.msra.mxu0 0
    %164 = vmatprep.subr.bf16.mxu0 0
    %165 = vmatpush1.bf16.msra.mxu0 0
    %166 = vmatprep.subr.bf16.mxu0 0
    %167 = vmatpush1.bf16.msra.mxu0 0
    %168 = vmatprep.mubr.bf16.mxu0 0
    %169 = vmatmul.mubr.bf16.gmra.mrb[0].mxu0 %v84
    %v170 = vpop.f32.mrb[0].mxu0
    %v171 = vadd.f32 0.0, %v170
    %v172 = vpop.f32.mrb[0].mxu0
    %v173 = vpop.f32.mrb[0].mxu0
    %v174 = vadd.f32 0.0, %v173
    %v175 = vpop.f32.mrb[0].mxu0
    %176 = vmatprep.mubr.bf16.mxu0 0
    %177 = vmatmul.mubr.bf16.gmra.mrb[0].mxu0 %v85
    %v178 = vpop.f32.mrb[0].mxu0
    %v179 = vadd.f32 0.0, %v178
    %v180 = vpop.f32.mrb[0].mxu0
    %v181 = vpop.f32.mrb[0].mxu0
    %v182 = vadd.f32 0.0, %v181
    %v183 = vpop.f32.mrb[0].mxu0
    %184 = vdwg.mxu0
    %v185 = vld [vmem:[#allocation6 + $0x1] sm:$0xff]
    %v186 = vld [vmem:[#allocation6 + $0x9] sm:$0xff]
    %v187 = vadd.f32 %v171, %v185
    %v188 = vadd.f32 %v174, %v186
    %v189 = vadd.f32 %v179, %v185
    %v190 = vadd.f32 %v182, %v186
    %191 = vst [vmem:[%s3 + $0x1] sm:$0xff] %v187
    %192 = vst [vmem:[%s3 + $0x9] sm:$0xff] %v188
    %193 = vst [vmem:[%s3 + $0x19] sm:$0xff] %v189
    %194 = vst [vmem:[%s3 + $0x21] sm:$0xff] %v190
    %v195 = vld [vmem:[#allocation6] sm:$0x1]
    %196 = vst [vmem:[%s3] sm:$0x1] %v195
    %197 = vst [vmem:[%s3 + $0x18] sm:$0x1] %v195
    // Predicated region
    $region26: #{tpu_custom_call.1} parent=1 // pred_check
      _
    $region27: #{tpu_custom_call.1} parent=1 // pred_check_branch
      %199 = sbr.rel (0) target = $region29
    $region28: #{tpu_custom_call.1} parent=1 // pred_region
      _
    $region29: #{tpu_custom_call.1} parent=1 // pred_fallthru
      _
    // Predicated region
    $region30: #{tpu_custom_call.1} parent=1 // pred_check
      _
    $region31: #{tpu_custom_call.1} parent=1 // pred_check_branch
      %201 = sbr.rel (0) target = $region33
    $region32: #{tpu_custom_call.1} parent=1 // pred_region
      _
    $region33: #{tpu_custom_call.1} parent=1 // pred_fallthru
      _
    %202 = vsyncpa [#allocation3], 1
    %203 = vsyncpa [#allocation5], 1

// kernel: tpu_custom_call.1
$region0: #{tpu_custom_call.1}
  #allocation0 [shape = 'u32[]', space=smem, size = 0x4, offset = 0x4, fixed_abs, tag = 'smem constant byte address 0x4 - core index']
  #allocation1 [shape = 'u32[144,128]{1,0:T(1,128)}', space=vmem, size = 0x12000, scoped, tag = 'internal scratch']
  %s0 = inlined_call_operand.hbm [shape: bf16[32,128], index: 0, kind: input, shape index: {}]
  %s1 = inlined_call_operand.hbm [shape: bf16[128,128], index: 1, kind: input, shape index: {}]
  %s2 = inlined_call_operand.hbm [shape: f32[17,128], index: 2, kind: input, shape index: {}]
  %s3 = inlined_call_operand.vmem [shape: f32[2,17,128], index: 3, kind: output, shape index: {}]
  %s4 = sld [smem:[#allocation0]]
  $region34: #{tpu_custom_call.1} parent=0
    _
  %s6 = ssub.s32 1, %s4
  %s7 = scalar_select 0, %s6, %s4
  $region1: #{tpu_custom_call.1} parent=0
    #allocation2 [shape = 'u8[8192]{0}', space=vmem, size = 0x2000, scoped, tag = 'input window, operand 0, single buffered']
    #allocation3 [shape = 's32[1]{0}', space=sflag, size = 0x4, scoped, tag = 'scoped memory for tpu_custom_call.1']
    #allocation4 [shape = 'u8[32768]{0}', space=vmem, size = 0x8000, scoped, tag = 'input window, operand 1, single buffered']
    #allocation5 [shape = 's32[1]{0}', space=sflag, size = 0x4, scoped, tag = 'scoped memory for tpu_custom_call.1']
    #allocation6 [shape = 'u8[12288]{0}', space=vmem, size = 0x3000, scoped, tag = 'input window, operand 2, single buffered']
    %8 = vsyncpa [#allocation3], 0
    %9 = vsyncpa [#allocation5], 0
    // Predicated region
    $region2: #{tpu_custom_call.1} parent=1 // pred_check
      _
    $region3: #{tpu_custom_call.1} parent=1 // pred_check_branch
      %11 = sbr.rel (0) target = $region5
    $region4: #{tpu_custom_call.1} parent=1 // pred_region
      %s13 = ssub.s32 256, 256
      %14 = vsyncadd [#allocation3], %s13
      %s15 = sshll.u32 [#allocation2], 4
      %s16 = int_to_ptr.vmem [resolvable:$true] %s15
      %21 = dma.hbm_to_vmem [thread:$0]  %s0, 256, %s16, [#allocation3], 64, 64, 4
    $region5: #{tpu_custom_call.1} parent=1 // pred_fallthru
      _
    // Predicated region
    $region6: #{tpu_custom_call.1} parent=1 // pred_check
      _
    $region7: #{tpu_custom_call.1} parent=1 // pred_check_branch
      %23 = sbr.rel (0) target = $region9
    $region8: #{tpu_custom_call.1} parent=1 // pred_region
      %s25 = ssub.s32 1024, 1024
      %26 = vsyncadd [#allocation5], %s25
      %s27 = sshll.u32 [#allocation4], 4
      %s28 = int_to_ptr.vmem [resolvable:$true] %s27
      %33 = dma.hbm_to_vmem [thread:$0]  %s1, 1024, %s28, [#allocation5], 64, 64, 4
    $region9: #{tpu_custom_call.1} parent=1 // pred_fallthru
      _
    // Predicated region
    $region10: #{tpu_custom_call.1} parent=1 // pred_check
      _
    $region11: #{tpu_custom_call.1} parent=1 // pred_check_branch
      %35 = sbr.rel (0) target = $region13
    $region12: #{tpu_custom_call.1} parent=1 // pred_region
      %s37 = ssub.s32 384, 384
      %38 = vsyncadd [#allocation5], %s37
      %s39 = sshll.u32 [#allocation6], 4
      %s40 = int_to_ptr.vmem [resolvable:$true] %s39
      %45 = dma.hbm_to_vmem [thread:$0]  %s2, 384, %s40, [#allocation5], 128, 128, 8
    $region13: #{tpu_custom_call.1} parent=1 // pred_fallthru
      _
    // Predicated region
    $region14: #{tpu_custom_call.1} parent=1 // pred_check
      _
    $region15: #{tpu_custom_call.1} parent=1 // pred_check_branch
      %47 = sbr.rel (0) target = $region17
    $region16: #{tpu_custom_call.1} parent=1 // pred_region
      %48 = dma.done [#allocation3], 256
    $region17: #{tpu_custom_call.1} parent=1 // pred_fallthru
      _
    // Predicated region
    $region18: #{tpu_custom_call.1} parent=1 // pred_check
      _
    $region19: #{tpu_custom_call.1} parent=1 // pred_check_branch
      %50 = sbr.rel (0) target = $region21
    $region20: #{tpu_custom_call.1} parent=1 // pred_region
      %51 = dma.done [#allocation5], 1024
    $region21: #{tpu_custom_call.1} parent=1 // pred_fallthru
      _
    // Predicated region
    $region22: #{tpu_custom_call.1} parent=1 // pred_check
      _
    $region23: #{tpu_custom_call.1} parent=1 // pred_check_branch
      %53 = sbr.rel (0) target = $region25
    $region24: #{tpu_custom_call.1} parent=1 // pred_region
      %54 = dma.done [#allocation5], 384
    $region25: #{tpu_custom_call.1} parent=1 // pred_fallthru
      _
    %v56 = vld [vmem:[#allocation2] sm:$0xf]
    %v57 = vld [vmem:[#allocation2 + $0x4] sm:$0xf]
    %v58 = vld [vmem:[#allocation2 + $0x8] sm:$0xf]
    %v59 = vld [vmem:[#allocation2 + $0xc] sm:$0xf]
    %v60 = vld [vmem:[#allocation4] sm:$0xf]
    %v61 = vld [vmem:[#allocation4 + $0x4] sm:$0xf]
    %v62 = vld [vmem:[#allocation4 + $0x8] sm:$0xf]
    %v63 = vld [vmem:[#allocation4 + $0xc] sm:$0xf]
    %v64 = vld [vmem:[#allocation4 + $0x10] sm:$0xf]
    %v65 = vld [vmem:[#allocation4 + $0x14] sm:$0xf]
    %v66 = vld [vmem:[#allocation4 + $0x18] sm:$0xf]
    %v67 = vld [vmem:[#allocation4 + $0x1c] sm:$0xf]
    %v68 = vld [vmem:[#allocation4 + $0x20] sm:$0xf]
    %v69 = vld [vmem:[#allocation4 + $0x24] sm:$0xf]
    %v70 = vld [vmem:[#allocation4 + $0x28] sm:$0xf]
    %v71 = vld [vmem:[#allocation4 + $0x2c] sm:$0xf]
    %v72 = vld [vmem:[#allocation4 + $0x30] sm:$0xf]
    %v73 = vld [vmem:[#allocation4 + $0x34] sm:$0xf]
    %v74 = vld [vmem:[#allocation4 + $0x38] sm:$0xf]
    %v75 = vld [vmem:[#allocation4 + $0x3c] sm:$0xf]
    %v80 = vunpack.c.l.b16 %v56
    %v81 = vunpack.c.l.b16 %v57
    %v82 = vunpack.c.l.b16 %v58
    %v83 = vunpack.c.l.b16 %v59
    %v84 = vpack.c.b16 %v81, %v80
    %v85 = vpack.c.b16 %v83, %v82
    %v104 = vunpack.c.l.b16 %v60
    %v105 = vunpack.c.l.b16 %v61
    %v106 = vunpack.c.l.b16 %v62
    %v107 = vunpack.c.l.b16 %v63
    %v108 = vunpack.c.l.b16 %v64
    %v109 = vunpack.c.l.b16 %v65
    %v110 = vunpack.c.l.b16 %v66
    %v111 = vunpack.c.l.b16 %v67
    %v112 = vunpack.c.l.b16 %v68
    %v113 = vunpack.c.l.b16 %v69
    %v114 = vunpack.c.l.b16 %v70
    %v115 = vunpack.c.l.b16 %v71
    %v116 = vunpack.c.l.b16 %v72
    %v117 = vunpack.c.l.b16 %v73
    %v118 = vunpack.c.l.b16 %v74
    %v119 = vunpack.c.l.b16 %v75
    %v120 = vpack.c.b16 %v105, %v104
    %v121 = vpack.c.b16 %v107, %v106
    %v122 = vpack.c.b16 %v109, %v108
    %v123 = vpack.c.b16 %v111, %v110
    %v124 = vpack.c.b16 %v113, %v112
    %v125 = vpack.c.b16 %v115, %v114
    %v126 = vpack.c.b16 %v117, %v116
    %v127 = vpack.c.b16 %v119, %v118
    %136 = vmatprep.subr.bf16.mxu0 0
    %137 = vmatpush1.bf16.msra.mxu0 %v120
    %138 = vmatprep.subr.bf16.mxu0 0
    %139 = vmatpush1.bf16.msra.mxu0 %v121
    %140 = vmatprep.subr.bf16.mxu0 0
    %141 = vmatpush1.bf16.msra.mxu0 %v122
    %142 = vmatprep.subr.bf16.mxu0 0
    %143 = vmatpush1.bf16.msra.mxu0 %v123
    %144 = vmatprep.subr.bf16.mxu0 0
    %145 = vmatpush1.bf16.msra.mxu0 %v124
    %146 = vmatprep.subr.bf16.mxu0 0
    %147 = vmatpush1.bf16.msra.mxu0 %v125
    %148 = vmatprep.subr.bf16.mxu0 0
    %149 = vmatpush1.bf16.msra.mxu0 %v126
    %150 = vmatprep.subr.bf16.mxu0 0
    %151 = vmatpush1.bf16.msra.mxu0 %v127
    %152 = vmatprep.subr.bf16.mxu0 0
    %153 = vmatpush1.bf16.msra.mxu0 0
    %154 = vmatprep.subr.bf16.mxu0 0
    %155 = vmatpush1.bf16.msra.mxu0 0
    %156 = vmatprep.subr.bf16.mxu0 0
    %157 = vmatpush1.bf16.msra.mxu0 0
    %158 = vmatprep.subr.bf16.mxu0 0
    %159 = vmatpush1.bf16.msra.mxu0 0
    %160 = vmatprep.subr.bf16.mxu0 0
    %161 = vmatpush1.bf16.msra.mxu0 0
    %162 = vmatprep.subr.bf16.mxu0 0
    %163 = vmatpush1.bf16.msra.mxu0 0
    %164 = vmatprep.subr.bf16.mxu0 0
    %165 = vmatpush1.bf16.msra.mxu0 0
    %166 = vmatprep.subr.bf16.mxu0 0
    %167 = vmatpush1.bf16.msra.mxu0 0
    %168 = vmatprep.mubr.bf16.mxu0 0
    %169 = vmatmul.mubr.bf16.gmra.mrb[0].mxu0 %v84
    %v170 = vpop.f32.mrb[0].mxu0
    %v171 = vadd.f32 0.0, %v170
    %v172 = vpop.f32.mrb[0].mxu0
    %v173 = vpop.f32.mrb[0].mxu0
    %v174 = vadd.f32 0.0, %v173
    %v175 = vpop.f32.mrb[0].mxu0
    %176 = vmatprep.mubr.bf16.mxu0 0
    %177 = vmatmul.mubr.bf16.gmra.mrb[0].mxu0 %v85
    %v178 = vpop.f32.mrb[0].mxu0
    %v179 = vadd.f32 0.0, %v178
    %v180 = vpop.f32.mrb[0].mxu0
    %v181 = vpop.f32.mrb[0].mxu0
    %v182 = vadd.f32 0.0, %v181
    %v183 = vpop.f32.mrb[0].mxu0
    %184 = vdwg.mxu0
    %v185 = vld [vmem:[#allocation6 + $0x1] sm:$0xff]
    %v186 = vld [vmem:[#allocation6 + $0x9] sm:$0xff]
    %v187 = vadd.f32 %v171, %v185
    %v188 = vadd.f32 %v174, %v186
    %v189 = vadd.f32 %v179, %v185
    %v190 = vadd.f32 %v182, %v186
    %191 = vst [vmem:[%s3 + $0x1] sm:$0xff] %v187
    %192 = vst [vmem:[%s3 + $0x9] sm:$0xff] %v188
    %193 = vst [vmem:[%s3 + $0x19] sm:$0xff] %v189
    %194 = vst [vmem:[%s3 + $0x21] sm:$0xff] %v190
    %v195 = vld [vmem:[#allocation6] sm:$0x1]
    %196 = vst [vmem:[%s3] sm:$0x1] %v195
    %197 = vst [vmem:[%s3 + $0x18] sm:$0x1] %v195
    // Predicated region
    $region26: #{tpu_custom_call.1} parent=1 // pred_check
      _
    $region27: #{tpu_custom_call.1} parent=1 // pred_check_branch
      %199 = sbr.rel (0) target = $region29
    $region28: #{tpu_custom_call.1} parent=1 // pred_region
      _
    $region29: #{tpu_custom_call.1} parent=1 // pred_fallthru
      _
    // Predicated region
    $region30: #{tpu_custom_call.1} parent=1 // pred_check
      _
    $region31: #{tpu_custom_call.1} parent=1 // pred_check_branch
      %201 = sbr.rel (0) target = $region33
    $region32: #{tpu_custom_call.1} parent=1 // pred_region
      _
    $region33: #{tpu_custom_call.1} parent=1 // pred_fallthru
      _
    %202 = vsyncpa [#allocation3], 1
    %203 = vsyncpa [#allocation5], 1

</llo_original>
